<compile_context>
chip_gen: v6e
topology: v6e:2x2x1
jax: 0.10.0
libtpu: 0.0.40
codegen_flags: <defaults>
</compile_context>

<pallas_src>
import functools

import jax
import jax.numpy as jnp
from jax import lax
from jax.experimental import pallas as pl
from jax.experimental.pallas import tpu as pltpu

ALPHA = 1.0  # DECLoss.alpha == 1 (hard-coded in the module)


def _round_up(x, m):
    return (x + m - 1) // m * m


def _vmem_physical_bytes(default=64 * 1024 * 1024):
    """Physical VMEM per core; conservative v7x-sized fallback (64 MiB)."""
    try:
        info = pltpu.get_tpu_info()
    except Exception:
        return default
    for name in ("vmem_capacity_bytes", "vmem_size_bytes", "vmem_bytes"):
        val = getattr(info, name, None)
        if val:
            return int(val)
    return default


def _fold_rows(a, rows_per_fold=8):
    """Sum a [T, K] tile down to [rows_per_fold, K] using aligned vreg adds
    (static slices on 8-row boundaries -> pure VALU, no per-tile XLU reduce)."""
    t = a.shape[0]
    acc = a[0:rows_per_fold, :]
    for g in range(1, t // rows_per_fold):
        acc = acc + a[g * rows_per_fold:(g + 1) * rows_per_fold, :]
    return acc


def _dec_loss_kernel(n_valid, k_valid, tile_n, k_pad, mask_rows, mask_cols,
                     resident,
                     x_ref, ct_ref, c2_ref, loss_ref,
                     f8_ref, kl8_ref, finv_ref, logf_ref):
    phase = pl.program_id(0)          # 0: accumulate f_k, 1: accumulate KL
    tile = pl.program_id(1)           # batch tile index
    last_tile = pl.num_programs(1) - 1

    @pl.when(jnp.logical_and(phase == 0, tile == 0))
    def _init():
        f8_ref[...] = jnp.zeros_like(f8_ref)
        kl8_ref[...] = jnp.zeros_like(kl8_ref)
        loss_ref[...] = jnp.zeros_like(loss_ref)

    col_ok = None
    if mask_cols:
        col_ok = lax.broadcasted_iota(jnp.int32, (1, k_pad), 1) < k_valid

    # Phase boundary (runs once, at the first phase-1 step): collapse the
    # [8, Kp] partial column sums into f, hoist 1/f and log(f) out of the loop.
    @pl.when(jnp.logical_and(phase == 1, tile == 0))
    def _collapse_f():
        f = jnp.sum(f8_ref[...], axis=0, keepdims=True)           # [1, Kp]
        f_safe = jnp.where(col_ok, f, 1.0) if mask_cols else f
        finv_ref[...] = pl.reciprocal(f_safe, approx=True)
        logf_ref[...] = jnp.log(f_safe)

    # ---- soft assignment q for this tile (needed by both phases) -----------
    if resident:
        start = pl.multiple_of(tile * tile_n, tile_n)
        x = x_ref[pl.ds(start, tile_n), :]                        # [TN, D]
    else:
        x = x_ref[...]                                            # [TN, D]
    # MXU: x @ c^T with the centers pre-transposed to [D, Kp] in the wrapper.
    xc = jnp.dot(x, ct_ref[...], preferred_element_type=jnp.float32)  # [TN,Kp]
    xf = x.astype(jnp.float32)
    x2 = jnp.sum(xf * xf, axis=1, keepdims=True)                  # [TN, 1]
    ns = jnp.maximum(x2 + c2_ref[...] - 2.0 * xc, 0.0)            # [TN, Kp]

    row_ok = None
    if mask_rows:
        row_id = lax.broadcasted_iota(jnp.int32, (tile_n, 1), 0) + tile * tile_n
        row_ok = row_id < n_valid

    # alpha = 1: ((1+ns)^-1)^(-(1+1)/2) == 1 + ns.
    num_raw = 1.0 + ns
    if mask_rows and mask_cols:
        ok = jnp.logical_and(row_ok, col_ok)
    elif mask_rows:
        ok = row_ok
    elif mask_cols:
        ok = col_ok
    else:
        ok = None
    num = num_raw if ok is None else jnp.where(ok, num_raw, 0.0)
    r = jnp.sum(num, axis=1, keepdims=True)                       # [TN, 1]
    r_safe = jnp.where(row_ok, r, 1.0) if mask_rows else r
    q = num * pl.reciprocal(r_safe, approx=True)                  # [TN, Kp]

    # ---- phase 0: accumulate cluster frequencies into [8, Kp] (VALU only) ---
    @pl.when(phase == 0)
    def _phase0():
        f8_ref[...] += _fold_rows(q)

    # ---- phase 1: target distribution p and KL accumulation ----------------
    @pl.when(phase == 1)
    def _phase1():
        w = (q * q) * finv_ref[...]                               # [TN, Kp]
        s = jnp.sum(w, axis=1, keepdims=True)                     # [TN, 1]
        s_safe = jnp.where(row_ok, s, 1.0) if mask_rows else s
        p = w * pl.reciprocal(s_safe, approx=True)                # [TN, Kp]

        # log(p/q) = log(num) - log(r*s) - log(f): one full-tile log per tile,
        # f-term hoisted, r/s logs fused.
        num_safe = num_raw if ok is None else jnp.where(ok, num_raw, 1.0)
        log_ratio = (jnp.log(num_safe) - jnp.log(r_safe * s_safe)
                     - logf_ref[...])
        kl8_ref[...] += _fold_rows(p * log_ratio)

    @pl.when(jnp.logical_and(phase == 1, tile == last_tile))
    def _finalize():
        loss_ref[...] = (jnp.sum(kl8_ref[...], keepdims=True)
                         * jnp.float32(1.0 / n_valid))


def dec_loss(batch, cluster_centers, *, tile_n=None, resident=None):
    """batch: [N, D], cluster_centers: [K, D]  ->  scalar float32 DEC loss."""
    n, d = batch.shape
    k, d2 = cluster_centers.shape
    assert d == d2, "embedding dims must match"

    compute_dtype = batch.dtype            # pick the MXU dtype explicitly
    itemsize = jnp.dtype(compute_dtype).itemsize

    # Lane-dense cluster axis; sublane-aligned batch tiles.
    k_pad = _round_up(max(k, 1), 128)

    # --- generation-aware VMEM budget (v7x: 64 MiB, v5e/v6e: 128 MiB) -------
    phys = _vmem_physical_bytes()
    budget = max(8 << 20, phys // 3)                  # working-set target
    vmem_limit = int(min(phys * 3 // 4, max(phys - (8 << 20), 32 << 20)))

    # Fixed VMEM, independent of tile_n (inputs are double-buffered by the
    # default pipeline even though their block index is constant).
    fixed = (2 * k_pad * d * itemsize                 # c^T
             + 2 * k_pad * 4                          # ||c||^2
             + 2 * 8 * k_pad * 4                      # f / KL accumulators
             + 2 * k_pad * 4)                         # hoisted 1/f, log(f)

    def _tile_bytes(t):                               # live f32 temporaries
        return t * (8 * k_pad + d) * 4

    def _fits_streaming(t):
        return fixed + 2 * t * d * itemsize + _tile_bytes(t) <= budget

    n8 = _round_up(max(n, 1), 8)
    if tile_n is None:
        cands = sorted({8, 16, 32, 64, 128, 256, 512, 1024, 2048, 4096, n8})
        fitting = [c for c in cands if _fits_streaming(c)] or [8]
        # Prefer large tiles (~0.35 us per grid step) but cap padding waste at
        # ~1/8 of the batch.
        low_pad = [c for c in fitting
                   if (_round_up(n, c) - n) * 8 <= max(n, 64)]
        if low_pad:
            tile_n = max(low_pad)
        else:
            tile_n = max([c for c in fitting if c <= n8] or [min(fitting)])
    tile_n = max(8, _round_up(int(tile_n), 8))
    n_pad = _round_up(n, tile_n)
    n_tiles = n_pad // tile_n

    # Keep x fully VMEM-resident across both phases when it fits the budget:
    # the KL pass then reads VMEM instead of re-streaming x from HBM.
    if resident is None:
        resident = (fixed + 2 * n_pad * d * itemsize + _tile_bytes(tile_n)
                    <= budget)
    # TODO(synk): for the streamed large-N path, phase 1 still recomputes q
    # from x; spilling bf16 `num` to an HBM scratch in phase 0 would trade the
    # second x pass for K-proportional traffic when D >> K.

    x = batch
    if n_pad != n:
        x = jnp.zeros((n_pad, d), compute_dtype).at[:n].set(batch)
    c = cluster_centers.astype(compute_dtype)
    if k_pad != k:
        c = jnp.zeros((k_pad, d), compute_dtype).at[:k].set(c)
    c_t = c.T                                          # one-time HBM transpose
    # Loop-invariant ||c||^2, hoisted out of the per-tile loop.
    c2 = jnp.sum(jnp.square(c.astype(jnp.float32)), axis=1, keepdims=True).T

    mask_rows = n_pad != n
    mask_cols = k_pad != k

    kernel = functools.partial(_dec_loss_kernel, n, k, tile_n, k_pad,
                               mask_rows, mask_cols, resident)

    if resident:
        x_spec = pl.BlockSpec((n_pad, d), lambda ph, i: (0, 0))    # resident x
    else:
        x_spec = pl.BlockSpec((tile_n, d), lambda ph, i: (i, 0))   # streamed x

    x_passes = 1 if resident else 2
    cost = pl.CostEstimate(
        flops=int(2 * 2 * n_pad * k_pad * d + 20 * n_pad * k_pad),
        transcendentals=int(n_pad * k_pad + 3 * n_pad + 2 * k_pad),
        bytes_accessed=int(x_passes * n_pad * d * itemsize
                           + k_pad * d * itemsize + 4 * k_pad + 4),
    )

    out = pl.pallas_call(
        kernel,
        out_shape=jax.ShapeDtypeStruct((1, 1), jnp.float32),
        grid_spec=pltpu.PrefetchScalarGridSpec(
            num_scalar_prefetch=0,
            grid=(2, n_tiles),                         # (phase, batch tile)
            in_specs=[
                x_spec,
                pl.BlockSpec((d, k_pad), lambda ph, i: (0, 0)),    # c^T
                pl.BlockSpec((1, k_pad), lambda ph, i: (0, 0)),    # ||c||^2
            ],
            out_specs=pl.BlockSpec((1, 1), lambda ph, i: (0, 0)),
            scratch_shapes=[
                pltpu.VMEM((8, k_pad), jnp.float32),   # f_k partial sums
                pltpu.VMEM((8, k_pad), jnp.float32),   # KL partial sums
                pltpu.VMEM((1, k_pad), jnp.float32),   # 1/f (hoisted)
                pltpu.VMEM((1, k_pad), jnp.float32),   # log f (hoisted)
            ],
        ),
        compiler_params=pltpu.CompilerParams(
            dimension_semantics=("arbitrary", "arbitrary"),
            vmem_limit_bytes=vmem_limit,
        ),
        cost_estimate=cost,
    )(x, c_t, c2)
    return out[0, 0]


def _dec_loss_ref(batch, cluster_centers):
    """Pure-JAX reference mirroring the PyTorch code literally."""
    ns = jnp.sum((batch[:, None, :].astype(jnp.float32)
                  - cluster_centers[None, :, :].astype(jnp.float32)) ** 2, axis=2)
    num = (1.0 + ns / ALPHA) ** (-1.0)
    num = num ** (-(ALPHA + 1.0) / 2.0)
    q = num / jnp.sum(num, axis=1, keepdims=True)
    w = q ** 2 / jnp.sum(q, axis=0, keepdims=True)
    p = w / jnp.sum(w, axis=1, keepdims=True)
    return jnp.sum(p * (jnp.log(p) - jnp.log(q))) / q.shape[0]


if __name__ == "__main__":
    key = jax.random.PRNGKey(0)
    k1, k2, k3, k4 = jax.random.split(key, 4)

    # Test 1: small [batch, embed] / [clusters, embed]; auto config keeps the
    # whole batch VMEM-resident (single tile per phase), cluster padding masked.
    N, D, K = 64, 32, 10
    batch = jax.random.normal(k1, (N, D), dtype=jnp.float32)
    centers = jax.random.normal(k2, (K, D), dtype=jnp.float32)
    loss = jax.block_until_ready(dec_loss(batch, centers))
    ref = jax.block_until_ready(_dec_loss_ref(batch, centers))
    assert jnp.isfinite(loss), "non-finite loss"
    # approx=True reciprocals (EUP) trade a little precision -> looser tolerance.
    assert jnp.allclose(loss, ref, rtol=2e-2, atol=3e-3), (loss, ref)

    # Test 2: forces the streamed (non-resident) path, multiple batch tiles
    # (grid = 2 phases x 4 tiles) and both row and cluster padding masks.
    N2, D2, K2 = 100, 48, 7
    batch2 = jax.random.normal(k3, (N2, D2), dtype=jnp.float32)
    centers2 = jax.random.normal(k4, (K2, D2), dtype=jnp.float32)
    loss2 = jax.block_until_ready(dec_loss(batch2, centers2, tile_n=32,
                                           resident=False))
    ref2 = jax.block_until_ready(_dec_loss_ref(batch2, centers2))
    assert jnp.isfinite(loss2), "non-finite loss (padded/streamed case)"
    assert jnp.allclose(loss2, ref2, rtol=2e-2, atol=3e-3), (loss2, ref2)

    print("KERNEL_OK")
</pallas_src>

<mosaic_0001>
module attributes {stable_mosaic.version = 11 : i64} {
  func.func @_dec_loss_kernel(%arg0: i32, %arg1: i32, %arg2: memref<64x32xf32, #tpu.memory_space<vmem>>, %arg3: memref<32x128xf32, #tpu.memory_space<vmem>>, %arg4: memref<1x128xf32, #tpu.memory_space<vmem>>, %arg5: memref<1x1xf32, #tpu.memory_space<vmem>>, %arg6: memref<8x128xf32, #tpu.memory_space<vmem>>, %arg7: memref<8x128xf32, #tpu.memory_space<vmem>>, %arg8: memref<1x128xf32, #tpu.memory_space<vmem>>, %arg9: memref<1x128xf32, #tpu.memory_space<vmem>>) attributes {dimension_semantics = [#tpu.dimension_semantics<arbitrary>, #tpu.dimension_semantics<arbitrary>], iteration_bounds = array<i64: 2, 1>, scalar_prefetch = 0 : i64, scratch_operands = 4 : i64, tpu.core_type = #tpu.core_type<tc>, window_params = [{pipeline_mode = #tpu.pipeline_mode<synchronous>, transform_indices = @transform_0, window_bounds = array<i64: 64, 32>}, {pipeline_mode = #tpu.pipeline_mode<synchronous>, transform_indices = @transform_1, window_bounds = array<i64: 32, 128>}, {pipeline_mode = #tpu.pipeline_mode<synchronous>, transform_indices = @transform_2, window_bounds = array<i64: 1, 128>}, {pipeline_mode = #tpu.pipeline_mode<synchronous>, transform_indices = @transform_3, window_bounds = array<i64: 1, 1>}]} {
    %c0_i32 = arith.constant 0 : i32
    %0 = arith.cmpi eq, %arg0, %c0_i32 : i32
    %c0_i32_0 = arith.constant 0 : i32
    %1 = arith.cmpi eq, %arg1, %c0_i32_0 : i32
    %2 = arith.andi %0, %1 : i1
    %3 = arith.extui %2 : i1 to i32
    %c0_i32_1 = arith.constant 0 : i32
    %4 = arith.cmpi ne, %3, %c0_i32_1 : i32
    scf.if %4 {
      %cst_21 = arith.constant 0.000000e+00 : f32
      %53 = vector.broadcast %cst_21 : f32 to vector<8x128xf32>
      %c0_22 = arith.constant 0 : index
      %c0_23 = arith.constant 0 : index
      %54 = vector.load %arg6[%c0_22, %c0_23] : memref<8x128xf32, #tpu.memory_space<vmem>>, vector<8x128xf32>
      tpu.vector_store %arg6[%c0_22, %c0_23], %53 {strides = array<i32>} : memref<8x128xf32, #tpu.memory_space<vmem>>, vector<8x128xf32>,
      %cst_24 = arith.constant 0.000000e+00 : f32
      %55 = vector.broadcast %cst_24 : f32 to vector<8x128xf32>
      %c0_25 = arith.constant 0 : index
      %c0_26 = arith.constant 0 : index
      %56 = vector.load %arg7[%c0_25, %c0_26] : memref<8x128xf32, #tpu.memory_space<vmem>>, vector<8x128xf32>
      tpu.vector_store %arg7[%c0_25, %c0_26], %55 {strides = array<i32>} : memref<8x128xf32, #tpu.memory_space<vmem>>, vector<8x128xf32>,
      %cst_27 = arith.constant 0.000000e+00 : f32
      %57 = vector.broadcast %cst_27 : f32 to vector<1x1xf32>
      %c0_28 = arith.constant 0 : index
      %c0_29 = arith.constant 0 : index
      %58 = vector.load %arg5[%c0_28, %c0_29] : memref<1x1xf32, #tpu.memory_space<vmem>>, vector<1x1xf32>
      tpu.vector_store %arg5[%c0_28, %c0_29], %57 {strides = array<i32>} : memref<1x1xf32, #tpu.memory_space<vmem>>, vector<1x1xf32>,
    } else {
    }
    %5 = tpu.iota {dimensions = array<i32: 1>} : vector<1x128xi32>
    %c10_i32 = arith.constant 10 : i32
    %6 = vector.broadcast %c10_i32 : i32 to vector<1x128xi32>
    %7 = arith.cmpi slt, %5, %6 : vector<1x128xi32>
    %c1_i32 = arith.constant 1 : i32
    %8 = arith.cmpi eq, %arg0, %c1_i32 : i32
    %c0_i32_2 = arith.constant 0 : i32
    %9 = arith.cmpi eq, %arg1, %c0_i32_2 : i32
    %10 = arith.andi %8, %9 : i1
    %11 = arith.extui %10 : i1 to i32
    %c0_i32_3 = arith.constant 0 : i32
    %12 = arith.cmpi ne, %11, %c0_i32_3 : i32
    scf.if %12 {
      %c0_21 = arith.constant 0 : index
      %c0_22 = arith.constant 0 : index
      %53 = vector.load %arg6[%c0_21, %c0_22] : memref<8x128xf32, #tpu.memory_space<vmem>>, vector<8x128xf32>
      %cst_23 = arith.constant dense<0.000000e+00> : vector<128xf32>
      %54 = vector.multi_reduction <add>, %53, %cst_23 [0] : vector<8x128xf32> to vector<128xf32>
      %55 = vector.shape_cast %54 : vector<128xf32> to vector<1x128xf32>
      %cst_24 = arith.constant 1.000000e+00 : f32
      %56 = vector.broadcast %cst_24 : f32 to vector<1x128xf32>
      %57 = arith.select %7, %55, %56 : vector<1x128xi1>, vector<1x128xf32>
      %58 = tpu.reciprocal %57 {approx = true} : vector<1x128xf32> -> vector<1x128xf32>
      %c0_25 = arith.constant 0 : index
      %c0_26 = arith.constant 0 : index
      %59 = vector.load %arg8[%c0_25, %c0_26] : memref<1x128xf32, #tpu.memory_space<vmem>>, vector<1x128xf32>
      tpu.vector_store %arg8[%c0_25, %c0_26], %58 {strides = array<i32>} : memref<1x128xf32, #tpu.memory_space<vmem>>, vector<1x128xf32>,
      %60 = math.log %57 : vector<1x128xf32>
      %c0_27 = arith.constant 0 : index
      %c0_28 = arith.constant 0 : index
      %61 = vector.load %arg9[%c0_27, %c0_28] : memref<1x128xf32, #tpu.memory_space<vmem>>, vector<1x128xf32>
      tpu.vector_store %arg9[%c0_27, %c0_28], %60 {strides = array<i32>} : memref<1x128xf32, #tpu.memory_space<vmem>>, vector<1x128xf32>,
    } else {
    }
    %c64_i32 = arith.constant 64 : i32
    %13 = arith.muli %arg1, %c64_i32 : i32
    %14 = tpu.assume_multiple %13, 64 : i32
    %15 = arith.index_cast %14 : i32 to index
    %c0 = arith.constant 0 : index
    %16 = vector.load %arg2[%15, %c0] : memref<64x32xf32, #tpu.memory_space<vmem>>, vector<64x32xf32>
    %c0_4 = arith.constant 0 : index
    %c0_5 = arith.constant 0 : index
    %17 = vector.load %arg3[%c0_4, %c0_5] : memref<32x128xf32, #tpu.memory_space<vmem>>, vector<32x128xf32>
    %cst = arith.constant dense<0.000000e+00> : vector<64x128xf32>
    %18 = tpu.matmul %16, %17, %cst {dimension_numbers = #tpu.dot_dimension_numbers<[1], [0], [0], [1], [0, 0, 1, 1], [], []>} : vector<64x32xf32>, vector<32x128xf32>, vector<64x128xf32> -> vector<64x128xf32>
    %19 = arith.mulf %16, %16 : vector<64x32xf32>
    %cst_6 = arith.constant dense<0.000000e+00> : vector<64xf32>
    %20 = vector.multi_reduction <add>, %19, %cst_6 [1] : vector<64x32xf32> to vector<64xf32>
    %21 = vector.shape_cast %20 : vector<64xf32> to vector<64x1xf32>
    %c0_7 = arith.constant 0 : index
    %c0_8 = arith.constant 0 : index
    %22 = vector.load %arg4[%c0_7, %c0_8] : memref<1x128xf32, #tpu.memory_space<vmem>>, vector<1x128xf32>
    %23 = vector.broadcast %21 : vector<64x1xf32> to vector<64x128xf32>
    %24 = vector.broadcast %22 : vector<1x128xf32> to vector<64x128xf32>
    %25 = arith.addf %23, %24 : vector<64x128xf32>
    %cst_9 = arith.constant 2.000000e+00 : f32
    %26 = vector.broadcast %cst_9 : f32 to vector<64x128xf32>
    %27 = arith.mulf %26, %18 : vector<64x128xf32>
    %28 = arith.subf %25, %27 : vector<64x128xf32>
    %cst_10 = arith.constant 0.000000e+00 : f32
    %29 = vector.broadcast %cst_10 : f32 to vector<64x128xf32>
    %30 = arith.maximumf %28, %29 : vector<64x128xf32>
    %cst_11 = arith.constant 1.000000e+00 : f32
    %31 = vector.broadcast %cst_11 : f32 to vector<64x128xf32>
    %32 = arith.addf %31, %30 : vector<64x128xf32>
    %cst_12 = arith.constant 0.000000e+00 : f32
    %33 = vector.shape_cast %7 : vector<1x128xi1> to vector<1x128xi1>
    %34 = vector.broadcast %33 : vector<1x128xi1> to vector<64x128xi1>
    %35 = vector.broadcast %cst_12 : f32 to vector<64x128xf32>
    %36 = arith.select %34, %32, %35 : vector<64x128xi1>, vector<64x128xf32>
    %cst_13 = arith.constant dense<0.000000e+00> : vector<64xf32>
    %37 = vector.multi_reduction <add>, %36, %cst_13 [1] : vector<64x128xf32> to vector<64xf32>
    %38 = vector.shape_cast %37 : vector<64xf32> to vector<64x1xf32>
    %39 = tpu.reciprocal %38 {approx = true} : vector<64x1xf32> -> vector<64x1xf32>
    %40 = vector.broadcast %39 : vector<64x1xf32> to vector<64x128xf32>
    %41 = arith.mulf %36, %40 : vector<64x128xf32>
    %c0_i32_14 = arith.constant 0 : i32
    %42 = arith.cmpi eq, %arg0, %c0_i32_14 : i32
    %43 = arith.extui %42 : i1 to i32
    %c0_i32_15 = arith.constant 0 : i32
    %44 = arith.cmpi ne, %43, %c0_i32_15 : i32
    scf.if %44 {
      %c0_21 = arith.constant 0 : index
      %c0_22 = arith.constant 0 : index
      %53 = vector.load %arg6[%c0_21, %c0_22] : memref<8x128xf32, #tpu.memory_space<vmem>>, vector<8x128xf32>
      %54 = vector.extract_strided_slice %41 {offsets = [0, 0], sizes = [8, 128], strides = [1, 1]} : vector<64x128xf32> to vector<8x128xf32>
      %55 = vector.extract_strided_slice %41 {offsets = [8, 0], sizes = [8, 128], strides = [1, 1]} : vector<64x128xf32> to vector<8x128xf32>
      %56 = arith.addf %54, %55 : vector<8x128xf32>
      %57 = vector.extract_strided_slice %41 {offsets = [16, 0], sizes = [8, 128], strides = [1, 1]} : vector<64x128xf32> to vector<8x128xf32>
      %58 = arith.addf %56, %57 : vector<8x128xf32>
      %59 = vector.extract_strided_slice %41 {offsets = [24, 0], sizes = [8, 128], strides = [1, 1]} : vector<64x128xf32> to vector<8x128xf32>
      %60 = arith.addf %58, %59 : vector<8x128xf32>
      %61 = vector.extract_strided_slice %41 {offsets = [32, 0], sizes = [8, 128], strides = [1, 1]} : vector<64x128xf32> to vector<8x128xf32>
      %62 = arith.addf %60, %61 : vector<8x128xf32>
      %63 = vector.extract_strided_slice %41 {offsets = [40, 0], sizes = [8, 128], strides = [1, 1]} : vector<64x128xf32> to vector<8x128xf32>
      %64 = arith.addf %62, %63 : vector<8x128xf32>
      %65 = vector.extract_strided_slice %41 {offsets = [48, 0], sizes = [8, 128], strides = [1, 1]} : vector<64x128xf32> to vector<8x128xf32>
      %66 = arith.addf %64, %65 : vector<8x128xf32>
      %67 = vector.extract_strided_slice %41 {offsets = [56, 0], sizes = [8, 128], strides = [1, 1]} : vector<64x128xf32> to vector<8x128xf32>
      %68 = arith.addf %66, %67 : vector<8x128xf32>
      %69 = arith.addf %53, %68 : vector<8x128xf32>
      %c0_23 = arith.constant 0 : index
      %c0_24 = arith.constant 0 : index
      %70 = vector.load %arg6[%c0_23, %c0_24] : memref<8x128xf32, #tpu.memory_space<vmem>>, vector<8x128xf32>
      tpu.vector_store %arg6[%c0_23, %c0_24], %69 {strides = array<i32>} : memref<8x128xf32, #tpu.memory_space<vmem>>, vector<8x128xf32>,
    } else {
    }
    %c1_i32_16 = arith.constant 1 : i32
    %45 = arith.cmpi eq, %arg0, %c1_i32_16 : i32
    %46 = arith.extui %45 : i1 to i32
    %c0_i32_17 = arith.constant 0 : i32
    %47 = arith.cmpi ne, %46, %c0_i32_17 : i32
    scf.if %47 {
      %53 = arith.mulf %41, %41 : vector<64x128xf32>
      %c0_21 = arith.constant 0 : index
      %c0_22 = arith.constant 0 : index
      %54 = vector.load %arg8[%c0_21, %c0_22] : memref<1x128xf32, #tpu.memory_space<vmem>>, vector<1x128xf32>
      %55 = vector.broadcast %54 : vector<1x128xf32> to vector<64x128xf32>
      %56 = arith.mulf %53, %55 : vector<64x128xf32>
      %cst_23 = arith.constant dense<0.000000e+00> : vector<64xf32>
      %57 = vector.multi_reduction <add>, %56, %cst_23 [1] : vector<64x128xf32> to vector<64xf32>
      %58 = vector.shape_cast %57 : vector<64xf32> to vector<64x1xf32>
      %59 = tpu.reciprocal %58 {approx = true} : vector<64x1xf32> -> vector<64x1xf32>
      %60 = vector.broadcast %59 : vector<64x1xf32> to vector<64x128xf32>
      %61 = arith.mulf %56, %60 : vector<64x128xf32>
      %cst_24 = arith.constant 1.000000e+00 : f32
      %62 = vector.shape_cast %7 : vector<1x128xi1> to vector<1x128xi1>
      %63 = vector.broadcast %62 : vector<1x128xi1> to vector<64x128xi1>
      %64 = vector.broadcast %cst_24 : f32 to vector<64x128xf32>
      %65 = arith.select %63, %32, %64 : vector<64x128xi1>, vector<64x128xf32>
      %66 = math.log %65 : vector<64x128xf32>
      %67 = arith.mulf %38, %58 : vector<64x1xf32>
      %68 = math.log %67 : vector<64x1xf32>
      %69 = vector.broadcast %68 : vector<64x1xf32> to vector<64x128xf32>
      %70 = arith.subf %66, %69 : vector<64x128xf32>
      %c0_25 = arith.constant 0 : index
      %c0_26 = arith.constant 0 : index
      %71 = vector.load %arg9[%c0_25, %c0_26] : memref<1x128xf32, #tpu.memory_space<vmem>>, vector<1x128xf32>
      %72 = vector.broadcast %71 : vector<1x128xf32> to vector<64x128xf32>
      %73 = arith.subf %70, %72 : vector<64x128xf32>
      %c0_27 = arith.constant 0 : index
      %c0_28 = arith.constant 0 : index
      %74 = vector.load %arg7[%c0_27, %c0_28] : memref<8x128xf32, #tpu.memory_space<vmem>>, vector<8x128xf32>
      %75 = arith.mulf %61, %73 : vector<64x128xf32>
      %76 = vector.extract_strided_slice %75 {offsets = [0, 0], sizes = [8, 128], strides = [1, 1]} : vector<64x128xf32> to vector<8x128xf32>
      %77 = vector.extract_strided_slice %75 {offsets = [8, 0], sizes = [8, 128], strides = [1, 1]} : vector<64x128xf32> to vector<8x128xf32>
      %78 = arith.addf %76, %77 : vector<8x128xf32>
      %79 = vector.extract_strided_slice %75 {offsets = [16, 0], sizes = [8, 128], strides = [1, 1]} : vector<64x128xf32> to vector<8x128xf32>
      %80 = arith.addf %78, %79 : vector<8x128xf32>
      %81 = vector.extract_strided_slice %75 {offsets = [24, 0], sizes = [8, 128], strides = [1, 1]} : vector<64x128xf32> to vector<8x128xf32>
      %82 = arith.addf %80, %81 : vector<8x128xf32>
      %83 = vector.extract_strided_slice %75 {offsets = [32, 0], sizes = [8, 128], strides = [1, 1]} : vector<64x128xf32> to vector<8x128xf32>
      %84 = arith.addf %82, %83 : vector<8x128xf32>
      %85 = vector.extract_strided_slice %75 {offsets = [40, 0], sizes = [8, 128], strides = [1, 1]} : vector<64x128xf32> to vector<8x128xf32>
      %86 = arith.addf %84, %85 : vector<8x128xf32>
      %87 = vector.extract_strided_slice %75 {offsets = [48, 0], sizes = [8, 128], strides = [1, 1]} : vector<64x128xf32> to vector<8x128xf32>
      %88 = arith.addf %86, %87 : vector<8x128xf32>
      %89 = vector.extract_strided_slice %75 {offsets = [56, 0], sizes = [8, 128], strides = [1, 1]} : vector<64x128xf32> to vector<8x128xf32>
      %90 = arith.addf %88, %89 : vector<8x128xf32>
      %91 = arith.addf %74, %90 : vector<8x128xf32>
      %c0_29 = arith.constant 0 : index
      %c0_30 = arith.constant 0 : index
      %92 = vector.load %arg7[%c0_29, %c0_30] : memref<8x128xf32, #tpu.memory_space<vmem>>, vector<8x128xf32>
      tpu.vector_store %arg7[%c0_29, %c0_30], %91 {strides = array<i32>} : memref<8x128xf32, #tpu.memory_space<vmem>>, vector<8x128xf32>,
    } else {
    }
    %c1_i32_18 = arith.constant 1 : i32
    %48 = arith.cmpi eq, %arg0, %c1_i32_18 : i32
    %c0_i32_19 = arith.constant 0 : i32
    %49 = arith.cmpi eq, %arg1, %c0_i32_19 : i32
    %50 = arith.andi %48, %49 : i1
    %51 = arith.extui %50 : i1 to i32
    %c0_i32_20 = arith.constant 0 : i32
    %52 = arith.cmpi ne, %51, %c0_i32_20 : i32
    scf.if %52 {
      %c0_21 = arith.constant 0 : index
      %c0_22 = arith.constant 0 : index
      %53 = vector.load %arg7[%c0_21, %c0_22] : memref<8x128xf32, #tpu.memory_space<vmem>>, vector<8x128xf32>
      %54 = vector.shape_cast %53 : vector<8x128xf32> to vector<1x8x128xf32>
      %cst_23 = arith.constant dense<0.000000e+00> : vector<1xf32>
      %55 = vector.multi_reduction <add>, %54, %cst_23 [1, 2] : vector<1x8x128xf32> to vector<1xf32>
      %56 = vector.shape_cast %55 : vector<1xf32> to vector<1x1x1xf32>
      %57 = vector.extract %56[0, 0, 0] : f32 from vector<1x1x1xf32>
      %58 = vector.broadcast %57 : f32 to vector<1x1xf32>
      %cst_24 = arith.constant 1.562500e-02 : f32
      %59 = vector.broadcast %cst_24 : f32 to vector<1x1xf32>
      %60 = arith.mulf %58, %59 : vector<1x1xf32>
      %c0_25 = arith.constant 0 : index
      %c0_26 = arith.constant 0 : index
      %61 = vector.load %arg5[%c0_25, %c0_26] : memref<1x1xf32, #tpu.memory_space<vmem>>, vector<1x1xf32>
      tpu.vector_store %arg5[%c0_25, %c0_26], %60 {strides = array<i32>} : memref<1x1xf32, #tpu.memory_space<vmem>>, vector<1x1xf32>,
    } else {
    }
    return
  }
  func.func @transform_0(%arg0: i32, %arg1: i32) -> (i32, i32) {
    %c0_i32 = arith.constant 0 : i32
    %c0_i32_0 = arith.constant 0 : i32
    %c0_i32_1 = arith.constant 0 : i32
    return %c0_i32, %c0_i32_0 : i32, i32
  }
  func.func @transform_1(%arg0: i32, %arg1: i32) -> (i32, i32) {
    %c0_i32 = arith.constant 0 : i32
    %c0_i32_0 = arith.constant 0 : i32
    %c0_i32_1 = arith.constant 0 : i32
    return %c0_i32, %c0_i32_0 : i32, i32
  }
  func.func @transform_2(%arg0: i32, %arg1: i32) -> (i32, i32) {
    %c0_i32 = arith.constant 0 : i32
    %c0_i32_0 = arith.constant 0 : i32
    %c0_i32_1 = arith.constant 0 : i32
    return %c0_i32, %c0_i32_0 : i32, i32
  }
  func.func @transform_3(%arg0: i32, %arg1: i32) -> (i32, i32) {
    %c0_i32 = arith.constant 0 : i32
    %c0_i32_0 = arith.constant 0 : i32
    %c0_i32_1 = arith.constant 0 : i32
    return %c0_i32, %c0_i32_0 : i32, i32
  }
}

</mosaic_0001>

<llo_original>
// kernel: tpu_custom_call.1
$region0: #{tpu_custom_call.1}
  #allocation0 [shape = 'u32[]', space=smem, size = 0x4, offset = 0x4, fixed_abs, tag = 'smem constant byte address 0x4 - core index']
  #allocation1 [shape = 'u32[144,128]{1,0:T(1,128)}', space=vmem, size = 0x12000, scoped, tag = 'internal scratch']
  #allocation2 [shape = 'f32[8,128]{1,0:T(8,128)}', space=vmem, size = 0x1000, scoped, tag = 'scratch operand']
  #allocation3 [shape = 'f32[8,128]{1,0:T(8,128)}', space=vmem, size = 0x1000, scoped, tag = 'scratch operand']
  #allocation4 [shape = 'f32[1,128]{1,0:T(1,128)}', space=vmem, size = 0x200, scoped, tag = 'scratch operand']
  #allocation5 [shape = 'f32[1,128]{1,0:T(1,128)}', space=vmem, size = 0x200, scoped, tag = 'scratch operand']
  %s0 = inlined_call_operand.vmem [shape: f32[64,32], index: 0, kind: input, shape index: {}]
  %s1 = inlined_call_operand.vmem [shape: f32[32,128], index: 1, kind: input, shape index: {}]
  %s2 = inlined_call_operand.vmem [shape: f32[1,128], index: 2, kind: input, shape index: {}]
  %s3 = inlined_call_operand.hbm [shape: f32[1,1], index: 3, kind: output, shape index: {}]
  %s4 = sld [smem:[#allocation0]]
  $region65: #{tpu_custom_call.1} parent=0
    _
  %s6 = ssub.s32 1, %s4
  %s7 = scalar_select 0, %s6, %s4
  $region1: #{tpu_custom_call.1} parent=0
    #allocation6 [shape = 'u8[512]{0}', space=vmem, size = 0x400, scoped, tag = 'output window, operand 0, single buffered']
    #allocation7 [shape = 's32[2]{0}', space=sflag, size = 0x8, scoped, tag = 'scoped memory for tpu_custom_call.1']
    %8 = vsyncpa [#allocation7], 0
    loop: start=0, step=1, limit=4
    $region2: #{tpu_custom_call.1} parent=1 // loop_pre_header
      _
    $region3: #{tpu_custom_call.1} parent=1 // loop_header
      %s10 = sphi 0, %s14
      %p11 = scmp.ge.s32.totalorder %s10, 4
      %s17 = sphi 0, %s29
      %s18 = sphi 0, %s25
      %s19 = sphi 0, %s17
      %s20 = sphi 0, %s18
      %s21 = sphi 0, %s19
      %s22 = sphi 0, %s20
      %s30 = sphi 0, %s30
      %s32 = sphi 0, %s30
      %s33 = sphi 0, %s32
      %s47 = sphi 0, %s33
      %s51 = sphi 0, %s51
      %s53 = sphi 0, %s51
      %s54 = sphi 0, %s53
      %s68 = sphi 0, %s54
      %s72 = sphi 0, %s72
      %s74 = sphi 0, %s72
      %s75 = sphi 0, %s74
      %s89 = sphi 0, %s75
      %s93 = sphi 0, %s93
      %s95 = sphi 0, %s93
      %s96 = sphi 0, %s95
      %s110 = sphi 0, %s96
    $region4: #{tpu_custom_call.1} parent=1 // loop_header_branch
      %13 = sbr.rel (%p11) target = $region8
    $region5: #{tpu_custom_call.1} parent=1 // loop_body
      %s15 = ssub.s32 %s10, 1
      %s16 = ssub.s32 %s10, 2
      %s23 = sadd.s32 1, %s18
      %p24 = scmp.ge.s32.totalorder %s23, 1
      %s25 = scalar_select %p24, 0, %s23
      %s26 = sadd.s32 1, %s17
      %s27 = scalar_select %p24, %s26, %s17
      %p28 = scmp.ge.s32.totalorder %s27, 2
      %s29 = scalar_select %p28, 0, %s27
      %s31 = sadd.s32 %s30, 1
      %p34 = scmp.eq.s32.totalorder %s10, 1
      %p35 = scmp.ne.s32.totalorder %s30, %s32
      %p36 = scmp.eq.s32.totalorder %s10, 0
      %p37 = por %p35, %p36
      %p38 = scmp.ne.s32.totalorder %s30, %s32
      %p39 = scmp.eq.s32.totalorder %s15, 1
      %p40 = por %p38, %p39
      %p41 = scmp.ne.s32.totalorder %s32, %s33
      %p42 = scmp.eq.s32.totalorder %s15, 0
      %p43 = por %p41, %p42
      %p44 = scmp.ne.s32.totalorder %s32, %s33
      %p45 = scmp.eq.s32.totalorder %s16, 1
      %p46 = por %p44, %p45
      %p48 = scmp.ne.s32.totalorder %s33, %s47
      %p49 = scmp.eq.s32.totalorder %s16, 0
      %p50 = por %p48, %p49
      %s52 = sadd.s32 %s51, 1
      %p55 = scmp.eq.s32.totalorder %s10, 1
      %p56 = scmp.ne.s32.totalorder %s51, %s53
      %p57 = scmp.eq.s32.totalorder %s10, 0
      %p58 = por %p56, %p57
      %p59 = scmp.ne.s32.totalorder %s51, %s53
      %p60 = scmp.eq.s32.totalorder %s15, 1
      %p61 = por %p59, %p60
      %p62 = scmp.ne.s32.totalorder %s53, %s54
      %p63 = scmp.eq.s32.totalorder %s15, 0
      %p64 = por %p62, %p63
      %p65 = scmp.ne.s32.totalorder %s53, %s54
      %p66 = scmp.eq.s32.totalorder %s16, 1
      %p67 = por %p65, %p66
      %p69 = scmp.ne.s32.totalorder %s54, %s68
      %p70 = scmp.eq.s32.totalorder %s16, 0
      %p71 = por %p69, %p70
      %s73 = sadd.s32 %s72, 1
      %p76 = scmp.eq.s32.totalorder %s10, 1
      %p77 = scmp.ne.s32.totalorder %s72, %s74
      %p78 = scmp.eq.s32.totalorder %s10, 0
      %p79 = por %p77, %p78
      %p80 = scmp.ne.s32.totalorder %s72, %s74
      %p81 = scmp.eq.s32.totalorder %s15, 1
      %p82 = por %p80, %p81
      %p83 = scmp.ne.s32.totalorder %s74, %s75
      %p84 = scmp.eq.s32.totalorder %s15, 0
      %p85 = por %p83, %p84
      %p86 = scmp.ne.s32.totalorder %s74, %s75
      %p87 = scmp.eq.s32.totalorder %s16, 1
      %p88 = por %p86, %p87
      %p90 = scmp.ne.s32.totalorder %s75, %s89
      %p91 = scmp.eq.s32.totalorder %s16, 0
      %p92 = por %p90, %p91
      %s94 = sadd.s32 %s93, 1
      %p97 = scmp.eq.s32.totalorder %s10, 1
      %p98 = scmp.ne.s32.totalorder %s93, %s95
      %p99 = scmp.eq.s32.totalorder %s10, 0
      %p100 = por %p98, %p99
      %p101 = scmp.ne.s32.totalorder %s93, %s95
      %p102 = scmp.eq.s32.totalorder %s15, 1
      %p103 = por %p101, %p102
      %p104 = scmp.ne.s32.totalorder %s95, %s96
      %p105 = scmp.eq.s32.totalorder %s15, 0
      %p106 = por %p104, %p105
      %p107 = scmp.ne.s32.totalorder %s95, %s96
      %p108 = scmp.eq.s32.totalorder %s16, 1
      %p109 = por %p107, %p108
      %p111 = scmp.ne.s32.totalorder %s96, %s110
      %p112 = scmp.eq.s32.totalorder %s16, 0
      %p113 = por %p111, %p112
      %p114 = scmp.le.s32.totalorder 1, %s10
      %p115 = scmp.lt.s32.totalorder %s10, 3
      %p116 = pnand %p114, %p115
      %p117 = pneg %p116
      // Predicated region
      $region9: #{tpu_custom_call.1} parent=5 // pred_check
        _
      $region10: #{tpu_custom_call.1} parent=5 // pred_check_branch
        %119 = sbr.rel (%p116) target = $region12
      $region11: #{tpu_custom_call.1} parent=5 // pred_region
        %s120 = ssub.s32 %s10, 1
        // Predicated region
        $region13: #{tpu_custom_call.1} parent=11 // pred_check
          %p121 = pneg %p43
        $region14: #{tpu_custom_call.1} parent=11 // pred_check_branch
          %123 = sbr.rel (%p121) target = $region16
        $region15: #{tpu_custom_call.1} parent=11 // pred_region
          _
        $region16: #{tpu_custom_call.1} parent=11 // pred_fallthru
          _
        // Predicated region
        $region17: #{tpu_custom_call.1} parent=11 // pred_check
          %p124 = pneg %p64
        $region18: #{tpu_custom_call.1} parent=11 // pred_check_branch
          %126 = sbr.rel (%p124) target = $region20
        $region19: #{tpu_custom_call.1} parent=11 // pred_region
          _
        $region20: #{tpu_custom_call.1} parent=11 // pred_fallthru
          _
        // Predicated region
        $region21: #{tpu_custom_call.1} parent=11 // pred_check
          %p127 = pneg %p85
        $region22: #{tpu_custom_call.1} parent=11 // pred_check_branch
          %129 = sbr.rel (%p127) target = $region24
        $region23: #{tpu_custom_call.1} parent=11 // pred_region
          _
        $region24: #{tpu_custom_call.1} parent=11 // pred_fallthru
          _
      $region12: #{tpu_custom_call.1} parent=5 // pred_fallthru
        _
      %p130 = scmp.lt.s32.totalorder %s10, 2
      // Predicated region
      $region25: #{tpu_custom_call.1} parent=5 // pred_check
        %p131 = pneg %p130
      $region26: #{tpu_custom_call.1} parent=5 // pred_check_branch
        %133 = sbr.rel (%p131) target = $region28
      $region27: #{tpu_custom_call.1} parent=5 // pred_region
        _
      $region28: #{tpu_custom_call.1} parent=5 // pred_fallthru
        _
      %p134 = scmp.le.s32.totalorder 1, %s10
      %p135 = scmp.lt.s32.totalorder %s10, 3
      %p136 = pnand %p134, %p135
      %p137 = pneg %p136
      // Predicated region
      $region29: #{tpu_custom_call.1} parent=5 // pred_check
        _
      $region30: #{tpu_custom_call.1} parent=5 // pred_check_branch
        %139 = sbr.rel (%p136) target = $region32
      $region31: #{tpu_custom_call.1} parent=5 // pred_region
        %s140 = ssub.s32 %s10, 1
        %p141 = pneg %p43
        %p142 = pneg %p40
        %p143 = pneg %p64
        %p144 = pneg %p61
        %p145 = pneg %p85
        %p146 = pneg %p82
        %p147 = pneg %p106
        %p148 = pneg %p103
        %p149 = scmp.eq.s32.totalorder %s19, 0
        %p150 = scmp.eq.s32.totalorder %s20, 0
        %p151 = pnand %p149, %p150
        %p152 = pneg %p151
        // Predicated region
        $region33: #{tpu_custom_call.1} parent=31 // pred_check
          _
        $region34: #{tpu_custom_call.1} parent=31 // pred_check_branch
          %154 = sbr.rel (%p151) target = $region36
        $region35: #{tpu_custom_call.1} parent=31 // pred_region
          %155 = vst [vmem:[#allocation2] sm:$0xff] 0.0
          %156 = vst [vmem:[#allocation3] sm:$0xff] 0.0
          %vm157 = vcmask 0
          %158 = vst.msk [vmem:[#allocation6] sm:$0x1] %vm157, 0.0
        $region36: #{tpu_custom_call.1} parent=31 // pred_fallthru
          _
        %v159 = vlaneseq
        %v160 = vand.u32 %v159, 127
        %vm161 = vcmp.lt.s32.totalorder %v160, 10
        %p162 = scmp.eq.s32.totalorder %s19, 1
        %p163 = pnand %p162, %p150
        %p164 = pneg %p163
        // Predicated region
        $region37: #{tpu_custom_call.1} parent=31 // pred_check
          _
        $region38: #{tpu_custom_call.1} parent=31 // pred_check_branch
          %166 = sbr.rel (%p163) target = $region40
        $region39: #{tpu_custom_call.1} parent=31 // pred_region
          %v167 = vld [vmem:[#allocation2] sm:$0xff]
          %v168 = vrot.slane %v167, 4
          %v169 = vadd.f32 %v167, %v168
          %v170 = vrot.slane %v169, 2
          %v171 = vadd.f32 %v169, %v170
          %v172 = vrot.slane %v171, 1
          %v173 = vadd.f32 %v171, %v172
          %v174 = vsel %vm161, %v173, 1.0
          %v175 = vrcp.pop %v174
          %176 = vst [vmem:[#allocation4] sm:$0x1] %v175
          %v177 = vlog2.pop %v174
          %v178 = vmul.f32 %v177, 0.6931472
          %179 = vst [vmem:[#allocation5] sm:$0x1] %v178
        $region40: #{tpu_custom_call.1} parent=31 // pred_fallthru
          _
        %s180 = smul.u32 %s20, 64
        %s181 = scalar_lea.vmem %s0, %s180
        %v182 = vld [vmem:[%s181] sm:$0xff]
        %v183 = vld [vmem:[%s181 + $0x8] sm:$0xff]
        %v184 = vld [vmem:[%s181 + $0x10] sm:$0xff]
        %v185 = vld [vmem:[%s181 + $0x18] sm:$0xff]
        %v186 = vld [vmem:[%s181 + $0x20] sm:$0xff]
        %v187 = vld [vmem:[%s181 + $0x28] sm:$0xff]
        %v188 = vld [vmem:[%s181 + $0x30] sm:$0xff]
        %v189 = vld [vmem:[%s181 + $0x38] sm:$0xff]
        %v190 = vld [vmem:[%s1] sm:$0xff]
        %v191 = vld [vmem:[%s1 + $0x8] sm:$0xff]
        %v192 = vld [vmem:[%s1 + $0x10] sm:$0xff]
        %v193 = vld [vmem:[%s1 + $0x18] sm:$0xff]
        %vm194 = vcmask 261120
        %v196 = vsel %vm194, %v182, 0
        %v199 = vsel %vm194, %v183, 0
        %v202 = vsel %vm194, %v184, 0
        %v205 = vsel %vm194, %v185, 0
        %v208 = vsel %vm194, %v186, 0
        %v211 = vsel %vm194, %v187, 0
        %v214 = vsel %vm194, %v188, 0
        %v217 = vsel %vm194, %v189, 0
        %219 = vmatprep.subr.mxu0 0.0
        %220 = vmatpush1.msra.mxu0 0.0
        %221 = vmatprep.subr.mxu0 0.0
        %222 = vmatpush1.msra.mxu0 0.0
        %223 = vmatprep.subr.mxu0 0.0
        %224 = vmatpush1.msra.mxu0 0.0
        %225 = vmatprep.subr.mxu0 0.0
        %226 = vmatpush1.msra.mxu0 0.0
        %227 = vmatprep.subr.mxu0 0.0
        %228 = vmatpush1.msra.mxu0 0.0
        %229 = vmatprep.subr.mxu0 0.0
        %230 = vmatpush1.msra.mxu0 0.0
        %231 = vmatprep.subr.mxu0 0.0
        %232 = vmatpush1.msra.mxu0 0.0
        %233 = vmatprep.subr.mxu0 0.0
        %234 = vmatpush1.msra.mxu0 0.0
        %235 = vmatprep.subr.mxu0 0.0
        %236 = vmatpush1.msra.mxu0 0.0
        %237 = vmatprep.subr.mxu0 0.0
        %238 = vmatpush1.msra.mxu0 0.0
        %239 = vmatprep.subr.mxu0 0.0
        %240 = vmatpush1.msra.mxu0 0.0
        %241 = vmatprep.subr.mxu0 0.0
        %242 = vmatpush1.msra.mxu0 0.0
        %243 = vmatprep.subr.mxu0 0.0
        %244 = vmatpush1.msra.mxu0 %v193
        %245 = vmatprep.subr.mxu0 0.0
        %246 = vmatpush1.msra.mxu0 %v192
        %247 = vmatprep.subr.mxu0 0.0
        %248 = vmatpush1.msra.mxu0 %v191
        %249 = vmatprep.subr.mxu0 0.0
        %250 = vmatpush1.msra.mxu0 %v190
        %251 = vmatprep.subr.mxu0 0.0
        %252 = vmatpush2.msra.mxu0 0.0
        %253 = vmatprep.subr.mxu0 0.0
        %254 = vmatpush2.msra.mxu0 0.0
        %255 = vmatprep.subr.mxu0 0.0
        %256 = vmatpush2.msra.mxu0 0.0
        %257 = vmatprep.subr.mxu0 0.0
        %258 = vmatpush2.msra.mxu0 0.0
        %259 = vmatprep.subr.mxu0 0.0
        %260 = vmatpush2.msra.mxu0 0.0
        %261 = vmatprep.subr.mxu0 0.0
        %262 = vmatpush2.msra.mxu0 0.0
        %263 = vmatprep.subr.mxu0 0.0
        %264 = vmatpush2.msra.mxu0 0.0
        %265 = vmatprep.subr.mxu0 0.0
        %266 = vmatpush2.msra.mxu0 0.0
        %267 = vmatprep.subr.mxu0 0.0
        %268 = vmatpush2.msra.mxu0 0.0
        %269 = vmatprep.subr.mxu0 0.0
        %270 = vmatpush2.msra.mxu0 0.0
        %271 = vmatprep.subr.mxu0 0.0
        %272 = vmatpush2.msra.mxu0 0.0
        %273 = vmatprep.subr.mxu0 0.0
        %274 = vmatpush2.msra.mxu0 0.0
        %275 = vmatprep.subr.mxu0 0.0
        %276 = vmatpush2.msra.mxu0 0.0
        %277 = vmatprep.subr.mxu0 0.0
        %278 = vmatpush2.msra.mxu0 0.0
        %279 = vmatprep.subr.mxu0 0.0
        %280 = vmatpush2.msra.mxu0 0.0
        %281 = vmatprep.subr.mxu0 0.0
        %282 = vmatpush2.msra.mxu0 0.0
        %283 = vmatprep.mubr.f32.mxu0 0.0
        %284 = vmatmul.mubr.f32.gmra.mxu0 %v196
        %v285 = vpop.f32.mrf.mxu0
        %v286 = vadd.f32 0.0, %v285
        %v287 = vpop.f32.mrf.mxu0
        %288 = vmatprep.mubr.f32.mxu0 0.0
        %289 = vmatmul.mubr.f32.gmra.mxu0 %v199
        %v290 = vpop.f32.mrf.mxu0
        %v291 = vadd.f32 0.0, %v290
        %v292 = vpop.f32.mrf.mxu0
        %293 = vmatprep.mubr.f32.mxu0 0.0
        %294 = vmatmul.mubr.f32.gmra.mxu0 %v202
        %v295 = vpop.f32.mrf.mxu0
        %v296 = vadd.f32 0.0, %v295
        %v297 = vpop.f32.mrf.mxu0
        %298 = vmatprep.mubr.f32.mxu0 0.0
        %299 = vmatmul.mubr.f32.gmra.mxu0 %v205
        %v300 = vpop.f32.mrf.mxu0
        %v301 = vadd.f32 0.0, %v300
        %v302 = vpop.f32.mrf.mxu0
        %303 = vmatprep.mubr.f32.mxu0 0.0
        %304 = vmatmul.mubr.f32.gmra.mxu0 %v208
        %v305 = vpop.f32.mrf.mxu0
        %v306 = vadd.f32 0.0, %v305
        %v307 = vpop.f32.mrf.mxu0
        %308 = vmatprep.mubr.f32.mxu0 0.0
        %309 = vmatmul.mubr.f32.gmra.mxu0 %v211
        %v310 = vpop.f32.mrf.mxu0
        %v311 = vadd.f32 0.0, %v310
        %v312 = vpop.f32.mrf.mxu0
        %313 = vmatprep.mubr.f32.mxu0 0.0
        %314 = vmatmul.mubr.f32.gmra.mxu0 %v214
        %v315 = vpop.f32.mrf.mxu0
        %v316 = vadd.f32 0.0, %v315
        %v317 = vpop.f32.mrf.mxu0
        %318 = vmatprep.mubr.f32.mxu0 0.0
        %319 = vmatmul.mubr.f32.gmra.mxu0 %v217
        %v320 = vpop.f32.mrf.mxu0
        %v321 = vadd.f32 0.0, %v320
        %v322 = vpop.f32.mrf.mxu0
        %323 = vdwg.mxu0
        %v324 = vmul.f32 %v182, %v182
        %v325 = vmul.f32 %v183, %v183
        %v326 = vmul.f32 %v184, %v184
        %v327 = vmul.f32 %v185, %v185
        %v328 = vmul.f32 %v186, %v186
        %v329 = vmul.f32 %v187, %v187
        %v330 = vmul.f32 %v188, %v188
        %v331 = vmul.f32 %v189, %v189
        %v332 = vsel %vm194, %v324, 0.0
        %333 = vadd.xlane.f32.xlu0 %v332
        %v334 = vpop.xlane.xlu0 %333
        %v335 = vsel %vm194, %v325, 0.0
        %336 = vadd.xlane.f32.xlu0 %v335
        %v337 = vpop.xlane.xlu0 %336
        %v338 = vsel %vm194, %v326, 0.0
        %339 = vadd.xlane.f32.xlu0 %v338
        %v340 = vpop.xlane.xlu0 %339
        %v341 = vsel %vm194, %v327, 0.0
        %342 = vadd.xlane.f32.xlu0 %v341
        %v343 = vpop.xlane.xlu0 %342
        %v344 = vsel %vm194, %v328, 0.0
        %345 = vadd.xlane.f32.xlu0 %v344
        %v346 = vpop.xlane.xlu0 %345
        %v347 = vsel %vm194, %v329, 0.0
        %348 = vadd.xlane.f32.xlu0 %v347
        %v349 = vpop.xlane.xlu0 %348
        %v350 = vsel %vm194, %v330, 0.0
        %351 = vadd.xlane.f32.xlu0 %v350
        %v352 = vpop.xlane.xlu0 %351
        %v353 = vsel %vm194, %v331, 0.0
        %354 = vadd.xlane.f32.xlu0 %v353
        %v355 = vpop.xlane.xlu0 %354
        %v356 = vld [vmem:[%s2] sm:$0x1]
        %v358 = vlaneseq
        %v359 = vshrl.u32 %v358, 7
        %v360 = vsub.s32 0, %v359
        %v361 = vrot.slane %v356, %v360
        %v363 = vadd.f32 %v334, %v361
        %v364 = vadd.f32 %v337, %v361
        %v365 = vadd.f32 %v340, %v361
        %v366 = vadd.f32 %v343, %v361
        %v367 = vadd.f32 %v346, %v361
        %v368 = vadd.f32 %v349, %v361
        %v369 = vadd.f32 %v352, %v361
        %v370 = vadd.f32 %v355, %v361
        %v371 = vmul.f32 %v286, 2.0
        %v372 = vmul.f32 %v291, 2.0
        %v373 = vmul.f32 %v296, 2.0
        %v374 = vmul.f32 %v301, 2.0
        %v375 = vmul.f32 %v306, 2.0
        %v376 = vmul.f32 %v311, 2.0
        %v377 = vmul.f32 %v316, 2.0
        %v378 = vmul.f32 %v321, 2.0
        %v379 = vsub.f32 %v363, %v371
        %v380 = vsub.f32 %v364, %v372
        %v381 = vsub.f32 %v365, %v373
        %v382 = vsub.f32 %v366, %v374
        %v383 = vsub.f32 %v367, %v375
        %v384 = vsub.f32 %v368, %v376
        %v385 = vsub.f32 %v369, %v377
        %v386 = vsub.f32 %v370, %v378
        %v387 = vmax.f32 %v379, 0.0
        %v388 = vmax.f32 %v380, 0.0
        %v389 = vmax.f32 %v381, 0.0
        %v390 = vmax.f32 %v382, 0.0
        %v391 = vmax.f32 %v383, 0.0
        %v392 = vmax.f32 %v384, 0.0
        %v393 = vmax.f32 %v385, 0.0
        %v394 = vmax.f32 %v386, 0.0
        %v395 = vadd.f32 %v387, 1.0
        %v396 = vadd.f32 %v388, 1.0
        %v397 = vadd.f32 %v389, 1.0
        %v398 = vadd.f32 %v390, 1.0
        %v399 = vadd.f32 %v391, 1.0
        %v400 = vadd.f32 %v392, 1.0
        %v401 = vadd.f32 %v393, 1.0
        %v402 = vadd.f32 %v394, 1.0
        %v403 = vsel %vm161, 1, 0
        %vm404 = vcmp.eq.s32.totalorder %v403, 1
        %v405 = vsel %vm404, %v395, 0.0
        %v406 = vsel %vm404, %v396, 0.0
        %v407 = vsel %vm404, %v397, 0.0
        %v408 = vsel %vm404, %v398, 0.0
        %v409 = vsel %vm404, %v399, 0.0
        %v410 = vsel %vm404, %v400, 0.0
        %v411 = vsel %vm404, %v401, 0.0
        %v412 = vsel %vm404, %v402, 0.0
        %413 = vadd.xlane.f32.xlu0 %v405
        %v414 = vpop.xlane.xlu0 %413
        %415 = vadd.xlane.f32.xlu0 %v406
        %v416 = vpop.xlane.xlu0 %415
        %417 = vadd.xlane.f32.xlu0 %v407
        %v418 = vpop.xlane.xlu0 %417
        %419 = vadd.xlane.f32.xlu0 %v408
        %v420 = vpop.xlane.xlu0 %419
        %421 = vadd.xlane.f32.xlu0 %v409
        %v422 = vpop.xlane.xlu0 %421
        %423 = vadd.xlane.f32.xlu0 %v410
        %v424 = vpop.xlane.xlu0 %423
        %425 = vadd.xlane.f32.xlu0 %v411
        %v426 = vpop.xlane.xlu0 %425
        %427 = vadd.xlane.f32.xlu0 %v412
        %v428 = vpop.xlane.xlu0 %427
        %v429 = vrcp.pop %v414
        %v430 = vrcp.pop %v416
        %v431 = vrcp.pop %v418
        %v432 = vrcp.pop %v420
        %v433 = vrcp.pop %v422
        %v434 = vrcp.pop %v424
        %v435 = vrcp.pop %v426
        %v436 = vrcp.pop %v428
        %v437 = vmul.f32 %v405, %v429
        %v438 = vmul.f32 %v406, %v430
        %v439 = vmul.f32 %v407, %v431
        %v440 = vmul.f32 %v408, %v432
        %v441 = vmul.f32 %v409, %v433
        %v442 = vmul.f32 %v410, %v434
        %v443 = vmul.f32 %v411, %v435
        %v444 = vmul.f32 %v412, %v436
        // Predicated region
        $region41: #{tpu_custom_call.1} parent=31 // pred_check
          %p445 = pneg %p149
        $region42: #{tpu_custom_call.1} parent=31 // pred_check_branch
          %447 = sbr.rel (%p445) target = $region44
        $region43: #{tpu_custom_call.1} parent=31 // pred_region
          %v448 = vld [vmem:[#allocation2] sm:$0xff]
          %v449 = vadd.f32 %v437, %v438
          %v450 = vadd.f32 %v449, %v439
          %v451 = vadd.f32 %v450, %v440
          %v452 = vadd.f32 %v451, %v441
          %v453 = vadd.f32 %v452, %v442
          %v454 = vadd.f32 %v453, %v443
          %v455 = vadd.f32 %v454, %v444
          %v456 = vadd.f32 %v448, %v455
          %457 = vst [vmem:[#allocation2] sm:$0xff] %v456
        $region44: #{tpu_custom_call.1} parent=31 // pred_fallthru
          _
        // Predicated region
        $region45: #{tpu_custom_call.1} parent=31 // pred_check
          %p458 = pneg %p162
        $region46: #{tpu_custom_call.1} parent=31 // pred_check_branch
          %460 = sbr.rel (%p458) target = $region48
        $region47: #{tpu_custom_call.1} parent=31 // pred_region
          %v461 = vmul.f32 %v437, %v437
          %v462 = vmul.f32 %v438, %v438
          %v463 = vmul.f32 %v439, %v439
          %v464 = vmul.f32 %v440, %v440
          %v465 = vmul.f32 %v441, %v441
          %v466 = vmul.f32 %v442, %v442
          %v467 = vmul.f32 %v443, %v443
          %v468 = vmul.f32 %v444, %v444
          %v469 = vld [vmem:[#allocation4] sm:$0x1]
          %v471 = vlaneseq
          %v472 = vshrl.u32 %v471, 7
          %v473 = vsub.s32 0, %v472
          %v474 = vrot.slane %v469, %v473
          %v476 = vmul.f32 %v461, %v474
          %v477 = vmul.f32 %v462, %v474
          %v478 = vmul.f32 %v463, %v474
          %v479 = vmul.f32 %v464, %v474
          %v480 = vmul.f32 %v465, %v474
          %v481 = vmul.f32 %v466, %v474
          %v482 = vmul.f32 %v467, %v474
          %v483 = vmul.f32 %v468, %v474
          %484 = vadd.xlane.f32.xlu0 %v476
          %v485 = vpop.xlane.xlu0 %484
          %486 = vadd.xlane.f32.xlu0 %v477
          %v487 = vpop.xlane.xlu0 %486
          %488 = vadd.xlane.f32.xlu0 %v478
          %v489 = vpop.xlane.xlu0 %488
          %490 = vadd.xlane.f32.xlu0 %v479
          %v491 = vpop.xlane.xlu0 %490
          %492 = vadd.xlane.f32.xlu0 %v480
          %v493 = vpop.xlane.xlu0 %492
          %494 = vadd.xlane.f32.xlu0 %v481
          %v495 = vpop.xlane.xlu0 %494
          %496 = vadd.xlane.f32.xlu0 %v482
          %v497 = vpop.xlane.xlu0 %496
          %498 = vadd.xlane.f32.xlu0 %v483
          %v499 = vpop.xlane.xlu0 %498
          %v500 = vrcp.pop %v485
          %v501 = vrcp.pop %v487
          %v502 = vrcp.pop %v489
          %v503 = vrcp.pop %v491
          %v504 = vrcp.pop %v493
          %v505 = vrcp.pop %v495
          %v506 = vrcp.pop %v497
          %v507 = vrcp.pop %v499
          %v508 = vmul.f32 %v476, %v500
          %v509 = vmul.f32 %v477, %v501
          %v510 = vmul.f32 %v478, %v502
          %v511 = vmul.f32 %v479, %v503
          %v512 = vmul.f32 %v480, %v504
          %v513 = vmul.f32 %v481, %v505
          %v514 = vmul.f32 %v482, %v506
          %v515 = vmul.f32 %v483, %v507
          %v516 = vsel %vm404, %v395, 1.0
          %v517 = vsel %vm404, %v396, 1.0
          %v518 = vsel %vm404, %v397, 1.0
          %v519 = vsel %vm404, %v398, 1.0
          %v520 = vsel %vm404, %v399, 1.0
          %v521 = vsel %vm404, %v400, 1.0
          %v522 = vsel %vm404, %v401, 1.0
          %v523 = vsel %vm404, %v402, 1.0
          %v524 = vlog2.pop %v516
          %v525 = vmul.f32 %v524, 0.6931472
          %v526 = vlog2.pop %v517
          %v527 = vmul.f32 %v526, 0.6931472
          %v528 = vlog2.pop %v518
          %v529 = vmul.f32 %v528, 0.6931472
          %v530 = vlog2.pop %v519
          %v531 = vmul.f32 %v530, 0.6931472
          %v532 = vlog2.pop %v520
          %v533 = vmul.f32 %v532, 0.6931472
          %v534 = vlog2.pop %v521
          %v535 = vmul.f32 %v534, 0.6931472
          %v536 = vlog2.pop %v522
          %v537 = vmul.f32 %v536, 0.6931472
          %v538 = vlog2.pop %v523
          %v539 = vmul.f32 %v538, 0.6931472
          %v540 = vmul.f32 %v414, %v485
          %v541 = vmul.f32 %v416, %v487
          %v542 = vmul.f32 %v418, %v489
          %v543 = vmul.f32 %v420, %v491
          %v544 = vmul.f32 %v422, %v493
          %v545 = vmul.f32 %v424, %v495
          %v546 = vmul.f32 %v426, %v497
          %v547 = vmul.f32 %v428, %v499
          %v548 = vlog2.pop %v540
          %v549 = vmul.f32 %v548, 0.6931472
          %v550 = vlog2.pop %v541
          %v551 = vmul.f32 %v550, 0.6931472
          %v552 = vlog2.pop %v542
          %v553 = vmul.f32 %v552, 0.6931472
          %v554 = vlog2.pop %v543
          %v555 = vmul.f32 %v554, 0.6931472
          %v556 = vlog2.pop %v544
          %v557 = vmul.f32 %v556, 0.6931472
          %v558 = vlog2.pop %v545
          %v559 = vmul.f32 %v558, 0.6931472
          %v560 = vlog2.pop %v546
          %v561 = vmul.f32 %v560, 0.6931472
          %v562 = vlog2.pop %v547
          %v563 = vmul.f32 %v562, 0.6931472
          %v564 = vsub.f32 %v525, %v549
          %v565 = vsub.f32 %v527, %v551
          %v566 = vsub.f32 %v529, %v553
          %v567 = vsub.f32 %v531, %v555
          %v568 = vsub.f32 %v533, %v557
          %v569 = vsub.f32 %v535, %v559
          %v570 = vsub.f32 %v537, %v561
          %v571 = vsub.f32 %v539, %v563
          %v572 = vld [vmem:[#allocation5] sm:$0x1]
          %v574 = vlaneseq
          %v575 = vshrl.u32 %v574, 7
          %v576 = vsub.s32 0, %v575
          %v577 = vrot.slane %v572, %v576
          %v579 = vsub.f32 %v564, %v577
          %v580 = vsub.f32 %v565, %v577
          %v581 = vsub.f32 %v566, %v577
          %v582 = vsub.f32 %v567, %v577
          %v583 = vsub.f32 %v568, %v577
          %v584 = vsub.f32 %v569, %v577
          %v585 = vsub.f32 %v570, %v577
          %v586 = vsub.f32 %v571, %v577
          %v587 = vld [vmem:[#allocation3] sm:$0xff]
          %v588 = vmul.f32 %v508, %v579
          %v589 = vmul.f32 %v509, %v580
          %v590 = vmul.f32 %v510, %v581
          %v591 = vmul.f32 %v511, %v582
          %v592 = vmul.f32 %v512, %v583
          %v593 = vmul.f32 %v513, %v584
          %v594 = vmul.f32 %v514, %v585
          %v595 = vmul.f32 %v515, %v586
          %v596 = vadd.f32 %v588, %v589
          %v597 = vadd.f32 %v596, %v590
          %v598 = vadd.f32 %v597, %v591
          %v599 = vadd.f32 %v598, %v592
          %v600 = vadd.f32 %v599, %v593
          %v601 = vadd.f32 %v600, %v594
          %v602 = vadd.f32 %v601, %v595
          %v603 = vadd.f32 %v587, %v602
          %604 = vst [vmem:[#allocation3] sm:$0xff] %v603
        $region48: #{tpu_custom_call.1} parent=31 // pred_fallthru
          _
        // Predicated region
        $region49: #{tpu_custom_call.1} parent=31 // pred_check
          _
        $region50: #{tpu_custom_call.1} parent=31 // pred_check_branch
          %606 = sbr.rel (%p163) target = $region52
        $region51: #{tpu_custom_call.1} parent=31 // pred_region
          %v607 = vld [vmem:[#allocation3] sm:$0xff]
          %608 = vadd.xlane.f32.xlu0 %v607
          %v609 = vpop.xlane.xlu0 %608
          %v610 = vrot.slane %v609, 4
          %v611 = vadd.f32 %v609, %v610
          %v612 = vrot.slane %v611, 2
          %v613 = vadd.f32 %v611, %v612
          %v614 = vrot.slane %v613, 1
          %v615 = vadd.f32 %v613, %v614
          %s616 = vtos %v615
          %v617 = vstv %s616
          %v618 = vmul.f32 %v617, 0.015625
          %vm619 = vcmask 0
          %620 = vst.msk [vmem:[#allocation6] sm:$0x1] %vm619, %v618
        $region52: #{tpu_custom_call.1} parent=31 // pred_fallthru
          _
        // Predicated region
        $region53: #{tpu_custom_call.1} parent=31 // pred_check
          %p621 = pneg %p103
        $region54: #{tpu_custom_call.1} parent=31 // pred_check_branch
          %623 = sbr.rel (%p621) target = $region56
        $region55: #{tpu_custom_call.1} parent=31 // pred_region
          %s625 = ssub.s32 16, 16
          %626 = vsyncadd [#allocation7], %s625
          %s628 = sshll.u32 [#allocation6], 4
          %s629 = int_to_ptr.vmem [resolvable:$true] %s628
          %631 = dma.vmem_to_hbm [thread:$0]  %s629, 16, %s3, [#allocation7]
        $region56: #{tpu_custom_call.1} parent=31 // pred_fallthru
          _
        // Predicated region
        $region57: #{tpu_custom_call.1} parent=31 // pred_check
          %p632 = pneg %p103
        $region58: #{tpu_custom_call.1} parent=31 // pred_check_branch
          %634 = sbr.rel (%p632) target = $region60
        $region59: #{tpu_custom_call.1} parent=31 // pred_region
          %635 = dma.done [#allocation7], 16
        $region60: #{tpu_custom_call.1} parent=31 // pred_fallthru
          _
      $region32: #{tpu_custom_call.1} parent=5 // pred_fallthru
        _
      %p636 = scmp.le.s32.totalorder 2, %s10
      // Predicated region
      $region61: #{tpu_custom_call.1} parent=5 // pred_check
        %p637 = pneg %p636
      $region62: #{tpu_custom_call.1} parent=5 // pred_check_branch
        %639 = sbr.rel (%p637) target = $region64
      $region63: #{tpu_custom_call.1} parent=5 // pred_region
        %s640 = ssub.s32 %s10, 2
      $region64: #{tpu_custom_call.1} parent=5 // pred_fallthru
        _
    $region6: #{tpu_custom_call.1} parent=1 // loop_footer
      %s14 = sadd.s32 1, %s10
    $region7: #{tpu_custom_call.1} parent=1 // loop_footer_branch
      %9 = sbr.rel target = $region3
    $region8: #{tpu_custom_call.1} parent=1 // loop_exit
      _
    %641 = vsyncpa [#allocation7], 1
    %s642 = scalar_lea.sflag [#allocation7], 1
    %643 = vsyncpa %s642, 1

</llo_original>
